<compile_context>
chip_gen: v5e
topology: v5e:2x2
jax: 0.10.0
libtpu: 0.0.40
codegen_flags: <defaults>
</compile_context>

<pallas_src>
import math
import functools

import jax
import jax.numpy as jnp
from jax import lax
from jax.experimental import pallas as pl
from jax.experimental.pallas import tpu as pltpu


def _i32c(v):
    """Python int -> int32 constant (two's-complement wraparound)."""
    v &= 0xFFFFFFFF
    if v >= 1 << 31:
        v -= 1 << 32
    return jnp.int32(v)


def _hash32(x):
    """lowbias32 integer hash; int32 arithmetic (wraps), logical shifts."""
    x = x ^ lax.shift_right_logical(x, jnp.int32(16))
    x = x * _i32c(0x7FEB352D)
    x = x ^ lax.shift_right_logical(x, jnp.int32(15))
    x = x * _i32c(0x846CA68B)
    x = x ^ lax.shift_right_logical(x, jnp.int32(16))
    return x


def _pe_kernel(*args, dropout_p, train):
    if train:
        seed_ref, x_ref, pos_ref, out_ref = args
    else:
        x_ref, pos_ref, out_ref = args
        seed_ref = None

    x = x_ref[...].astype(jnp.float32)
    p = pos_ref[...].astype(jnp.float32)
    if x.ndim == 3:           # (ts, batch, emb) + (ts, emb) broadcast over batch
        y = x + p[:, None, :]
    else:                     # flattened: (rows, emb) + (rows, emb)
        y = x + p

    if train and dropout_p > 0.0:
        shape = y.shape
        if y.ndim == 3:
            ts, b, e = shape
            s_idx = lax.broadcasted_iota(jnp.int32, shape, 0) + pl.program_id(0) * ts
            b_idx = lax.broadcasted_iota(jnp.int32, shape, 1)
            e_idx = lax.broadcasted_iota(jnp.int32, shape, 2)
            lin = (s_idx * b + b_idx) * e + e_idx
        else:
            r, e = shape
            r_idx = lax.broadcasted_iota(jnp.int32, shape, 0) + pl.program_id(0) * r
            e_idx = lax.broadcasted_iota(jnp.int32, shape, 1)
            lin = r_idx * e + e_idx
        bits = _hash32(lin ^ _hash32(seed_ref[0]))
        thresh = jnp.int32(int(round(float(dropout_p) * float(1 << 24))))
        keep = (bits & jnp.int32(0x00FFFFFF)) >= thresh       # drop w.p. ~p
        y = jnp.where(keep, y * jnp.float32(1.0 / (1.0 - float(dropout_p))),
                      jnp.float32(0.0))

    out_ref[...] = y.astype(out_ref.dtype)


def make_pos_embedding(emb_size, maxlen=5000, dtype=jnp.float32):
    """Sinusoidal table, identical to the PyTorch module's buffer (squeezed)."""
    den = jnp.exp(-jnp.arange(0, emb_size, 2, dtype=jnp.float32)
                  * (math.log(10000.0) / emb_size))
    pos = jnp.arange(0, maxlen, dtype=jnp.float32).reshape(maxlen, 1)
    pe = jnp.zeros((maxlen, emb_size), dtype=jnp.float32)
    pe = pe.at[:, 0::2].set(jnp.sin(pos * den))
    pe = pe.at[:, 1::2].set(jnp.cos(pos * den))
    return pe.astype(dtype)


def _round_up(v, m):
    return -(-v // m) * m


def positional_encoding(token_embedding, pos_table, *, dropout_p=0.0,
                        train=False, seed=0, vmem_budget_bytes=24 << 20):
    """token_embedding: (seq, batch, emb); pos_table: (maxlen, emb).

    Returns dropout(token_embedding + pos_table[:seq, None, :]).
    """
    seq, batch, emb = token_embedding.shape
    assert pos_table.shape[1] == emb and pos_table.shape[0] >= seq
    dtype = token_embedding.dtype
    itemsize = jnp.dtype(dtype).itemsize
    use_dropout = bool(train) and float(dropout_p) > 0.0

    pos = pos_table[:seq].astype(dtype)

    if batch >= 8:
        # 3-D blocking: (ts, batch, emb) tiles; batch maps to sublanes (dense).
        pad_b = _round_up(batch, 8)
        per_row = (2 * pad_b + 1) * emb * itemsize           # x + out + pos, per seq row
        ts = (vmem_budget_bytes // (2 * per_row)) // 8 * 8   # /2: double buffering
        ts = max(8, ts)
        if ts >= seq:
            ts = seq
        x_arg, pos_arg = token_embedding, pos
        x_block, pos_block = (ts, batch, emb), (ts, emb)
        x_imap = lambda i, *_: (i, 0, 0)
        pos_imap = lambda i, *_: (i, 0)
        grid = (pl.cdiv(seq, ts),)
        out_shape = jax.ShapeDtypeStruct((seq, batch, emb), dtype)
        pad_ts = _round_up(ts, 8)
        footprint = 2 * (2 * pad_ts * pad_b * emb + pad_ts * emb) * itemsize
        flat = False
    else:
        # Flatten (seq, batch) -> rows so sublanes stay dense for tiny batch.
        n_rows = seq * batch
        x_arg = token_embedding.reshape(n_rows, emb)
        pos_arg = jnp.broadcast_to(pos[:, None, :], (seq, batch, emb)).reshape(n_rows, emb)
        per_row = 3 * emb * itemsize
        tr = (vmem_budget_bytes // (2 * per_row)) // 8 * 8
        tr = max(8, tr)
        if tr >= n_rows:
            tr = n_rows
        x_block = pos_block = (tr, emb)
        x_imap = pos_imap = lambda i, *_: (i, 0)
        grid = (pl.cdiv(n_rows, tr),)
        out_shape = jax.ShapeDtypeStruct((n_rows, emb), dtype)
        pad_tr = _round_up(tr, 8)
        footprint = 2 * 3 * pad_tr * emb * itemsize
        flat = True

    vmem_limit = int(min(max(footprint + (2 << 20), 8 << 20), 64 << 20))
    compiler_params = pltpu.CompilerParams(
        dimension_semantics=("parallel",),
        vmem_limit_bytes=vmem_limit,
    )

    kernel = functools.partial(_pe_kernel, dropout_p=float(dropout_p),
                               train=use_dropout)
    in_specs = [pl.BlockSpec(x_block, x_imap), pl.BlockSpec(pos_block, pos_imap)]
    out_spec = pl.BlockSpec(x_block, x_imap)

    if use_dropout:
        seed_arr = jnp.asarray([seed], dtype=jnp.int32)
        out = pl.pallas_call(
            kernel,
            out_shape=out_shape,
            grid_spec=pltpu.PrefetchScalarGridSpec(
                num_scalar_prefetch=1, grid=grid,
                in_specs=in_specs, out_specs=out_spec),
            compiler_params=compiler_params,
        )(seed_arr, x_arg, pos_arg)
    else:
        out = pl.pallas_call(
            kernel,
            out_shape=out_shape,
            grid_spec=pl.GridSpec(grid=grid, in_specs=in_specs, out_specs=out_spec),
            compiler_params=compiler_params,
        )(x_arg, pos_arg)

    if flat:
        out = out.reshape(seq, batch, emb)
    return out


if __name__ == "__main__":
    emb_size = 128
    maxlen = 32
    dropout_p = 0.1

    key = jax.random.PRNGKey(0)
    pos_table = make_pos_embedding(emb_size, maxlen)

    # ---- small batch (flattened, sublane-dense) path ----
    seq, batch = 8, 2
    x = jax.random.normal(key, (seq, batch, emb_size), dtype=jnp.float32)
    ref = x + pos_table[:seq][:, None, :]

    out_eval = jax.block_until_ready(
        positional_encoding(x, pos_table, dropout_p=dropout_p, train=False))
    assert out_eval.shape == (seq, batch, emb_size)
    assert jnp.allclose(out_eval, ref, atol=1e-6, rtol=1e-6), "eval mismatch (flat path)"

    out_train = jax.block_until_ready(
        positional_encoding(x, pos_table, dropout_p=dropout_p, train=True, seed=1234))
    scaled_ref = ref / (1.0 - dropout_p)
    kept = out_train != 0.0
    # every surviving element must equal (x + pos) / (1 - p)
    assert jnp.allclose(jnp.where(kept, out_train, scaled_ref), scaled_ref,
                        atol=1e-5, rtol=1e-5), "train kept-values mismatch"
    drop_frac = 1.0 - float(jnp.mean(kept.astype(jnp.float32)))
    assert 0.02 < drop_frac < 0.25, f"implausible drop fraction {drop_frac}"

    # ---- batch >= 8 (3-D blocked) path, eval ----
    seq2, batch2 = 8, 8
    x2 = jax.random.normal(jax.random.PRNGKey(1), (seq2, batch2, emb_size),
                           dtype=jnp.float32)
    ref2 = x2 + pos_table[:seq2][:, None, :]
    out2 = jax.block_until_ready(
        positional_encoding(x2, pos_table, dropout_p=dropout_p, train=False))
    assert jnp.allclose(out2, ref2, atol=1e-6, rtol=1e-6), "eval mismatch (3-D path)"

    print("KERNEL_OK")
</pallas_src>

<mosaic_0001>
module attributes {stable_mosaic.version = 11 : i64} {
  func.func @_pe_kernel(%arg0: i32, %arg1: memref<16x128xf32, #tpu.memory_space<vmem>>, %arg2: memref<16x128xf32, #tpu.memory_space<vmem>>, %arg3: memref<16x128xf32, #tpu.memory_space<vmem>>) attributes {dimension_semantics = [#tpu.dimension_semantics<parallel>], iteration_bounds = array<i64: 1>, scalar_prefetch = 0 : i64, scratch_operands = 0 : i64, tpu.core_type = #tpu.core_type<tc>, window_params = [{transform_indices = @transform_0, window_bounds = array<i64: 16, 128>}, {transform_indices = @transform_1, window_bounds = array<i64: 16, 128>}, {transform_indices = @transform_2, window_bounds = array<i64: 16, 128>}]} {
    %c0 = arith.constant 0 : index
    %c0_0 = arith.constant 0 : index
    %0 = vector.load %arg1[%c0, %c0_0] : memref<16x128xf32, #tpu.memory_space<vmem>>, vector<16x128xf32>
    %c0_1 = arith.constant 0 : index
    %c0_2 = arith.constant 0 : index
    %1 = vector.load %arg2[%c0_1, %c0_2] : memref<16x128xf32, #tpu.memory_space<vmem>>, vector<16x128xf32>
    %2 = arith.addf %0, %1 : vector<16x128xf32>
    %c0_3 = arith.constant 0 : index
    %c0_4 = arith.constant 0 : index
    %3 = vector.load %arg3[%c0_3, %c0_4] : memref<16x128xf32, #tpu.memory_space<vmem>>, vector<16x128xf32>
    tpu.vector_store %arg3[%c0_3, %c0_4], %2 {strides = array<i32>} : memref<16x128xf32, #tpu.memory_space<vmem>>, vector<16x128xf32>,
    return
  }
  func.func @transform_0(%arg0: i32) -> (i32, i32) {
    %c0_i32 = arith.constant 0 : i32
    %c0_i32_0 = arith.constant 0 : i32
    return %arg0, %c0_i32 : i32, i32
  }
  func.func @transform_1(%arg0: i32) -> (i32, i32) {
    %c0_i32 = arith.constant 0 : i32
    %c0_i32_0 = arith.constant 0 : i32
    return %arg0, %c0_i32 : i32, i32
  }
  func.func @transform_2(%arg0: i32) -> (i32, i32) {
    %c0_i32 = arith.constant 0 : i32
    %c0_i32_0 = arith.constant 0 : i32
    return %arg0, %c0_i32 : i32, i32
  }
}

</mosaic_0001>

<llo_original>
// kernel: tpu_custom_call.1
$region0: #{tpu_custom_call.1}
  #allocation0 [shape = 'u32[]', space=smem, size = 0x4, offset = 0x4, fixed_abs, tag = 'smem constant byte address 0x4 - core index']
  #allocation1 [shape = 'u32[72,128]{1,0:T(1,128)}', space=vmem, size = 0x9000, scoped, tag = 'internal scratch']
  %s0 = inlined_call_operand.hbm [shape: f32[16,128], index: 0, kind: input, shape index: {}]
  %s1 = inlined_call_operand.hbm [shape: f32[16,128], index: 1, kind: input, shape index: {}]
  %s2 = inlined_call_operand.hbm [shape: f32[16,128], index: 2, kind: output, shape index: {}]
  %s3 = sld [smem:[#allocation0]]
  $region26: #{tpu_custom_call.1} parent=0
    _
  %s5 = ssub.s32 1, %s3
  %s6 = scalar_select 0, %s5, %s3
  $region1: #{tpu_custom_call.1} parent=0
    #allocation2 [shape = 'u8[8192]{0}', space=vmem, size = 0x2000, scoped, tag = 'input window, operand 0, single buffered']
    #allocation3 [shape = 's32[1]{0}', space=sflag, size = 0x4, scoped, tag = 'scoped memory for tpu_custom_call.1']
    #allocation4 [shape = 's32[1]{0}', space=sflag, size = 0x4, scoped, tag = 'scoped memory for tpu_custom_call.1']
    #allocation5 [shape = 'u8[8192]{0}', space=vmem, size = 0x2000, scoped, tag = 'input window, operand 1, single buffered']
    #allocation6 [shape = 's32[1]{0}', space=sflag, size = 0x4, scoped, tag = 'scoped memory for tpu_custom_call.1']
    #allocation7 [shape = 'u8[8192]{0}', space=vmem, size = 0x2000, scoped, tag = 'output window, operand 0, single buffered']
    %7 = vsyncpa [#allocation3], 0
    %8 = vsyncpa [#allocation6], 0
    %9 = vsyncpa [#allocation4], 0
    // Predicated region
    $region2: #{tpu_custom_call.1} parent=1 // pred_check
      _
    $region3: #{tpu_custom_call.1} parent=1 // pred_check_branch
      %11 = sbr.rel (0) target = $region5
    $region4: #{tpu_custom_call.1} parent=1 // pred_region
      %13 = vsyncadd [#allocation3], 0
      %s14 = sshll.u32 %s0, 4
      %s15 = int_to_ptr.hbm [resolvable:$true] %s14
      %s16 = sshll.u32 [#allocation2], 4
      %s17 = int_to_ptr.vmem [resolvable:$true] %s16
      %22 = dma.hbm_to_vmem [thread:$0]  %s15, 256, %s17, [#allocation3], 128, 128, 8
    $region5: #{tpu_custom_call.1} parent=1 // pred_fallthru
      _
    // Predicated region
    $region6: #{tpu_custom_call.1} parent=1 // pred_check
      _
    $region7: #{tpu_custom_call.1} parent=1 // pred_check_branch
      %24 = sbr.rel (0) target = $region9
    $region8: #{tpu_custom_call.1} parent=1 // pred_region
      %26 = vsyncadd [#allocation6], 0
      %s27 = sshll.u32 %s1, 4
      %s28 = int_to_ptr.hbm [resolvable:$true] %s27
      %s29 = sshll.u32 [#allocation5], 4
      %s30 = int_to_ptr.vmem [resolvable:$true] %s29
      %35 = dma.hbm_to_vmem [thread:$0]  %s28, 256, %s30, [#allocation6], 128, 128, 8
    $region9: #{tpu_custom_call.1} parent=1 // pred_fallthru
      _
    // Predicated region
    $region10: #{tpu_custom_call.1} parent=1 // pred_check
      _
    $region11: #{tpu_custom_call.1} parent=1 // pred_check_branch
      %37 = sbr.rel (0) target = $region13
    $region12: #{tpu_custom_call.1} parent=1 // pred_region
      %39 = dma.done [#allocation3], 256
    $region13: #{tpu_custom_call.1} parent=1 // pred_fallthru
      _
    // Predicated region
    $region14: #{tpu_custom_call.1} parent=1 // pred_check
      _
    $region15: #{tpu_custom_call.1} parent=1 // pred_check_branch
      %41 = sbr.rel (0) target = $region17
    $region16: #{tpu_custom_call.1} parent=1 // pred_region
      %43 = dma.done [#allocation6], 256
    $region17: #{tpu_custom_call.1} parent=1 // pred_fallthru
      _
    %v44 = vld [vmem:[#allocation2] sm:$0xff]
    %v45 = vld [vmem:[#allocation2 + $0x8] sm:$0xff]
    %v46 = vld [vmem:[#allocation5] sm:$0xff]
    %v47 = vld [vmem:[#allocation5 + $0x8] sm:$0xff]
    %v48 = vadd.f32 %v44, %v46
    %v49 = vadd.f32 %v45, %v47
    %50 = vst [vmem:[#allocation7] sm:$0xff] %v48
    %51 = vst [vmem:[#allocation7 + $0x8] sm:$0xff] %v49
    // Predicated region
    $region18: #{tpu_custom_call.1} parent=1 // pred_check
      _
    $region19: #{tpu_custom_call.1} parent=1 // pred_check_branch
      %53 = sbr.rel (0) target = $region21
    $region20: #{tpu_custom_call.1} parent=1 // pred_region
      %55 = vsyncadd [#allocation4], 0
      %s56 = sshll.u32 [#allocation7], 4
      %s57 = int_to_ptr.vmem [resolvable:$true] %s56
      %s58 = sshll.u32 %s2, 4
      %s59 = int_to_ptr.hbm [resolvable:$true] %s58
      %64 = dma.vmem_to_hbm [thread:$0]  %s57, 256, %s59, [#allocation4], 128, 128, 8
    $region21: #{tpu_custom_call.1} parent=1 // pred_fallthru
      _
    // Predicated region
    $region22: #{tpu_custom_call.1} parent=1 // pred_check
      _
    $region23: #{tpu_custom_call.1} parent=1 // pred_check_branch
      %66 = sbr.rel (0) target = $region25
    $region24: #{tpu_custom_call.1} parent=1 // pred_region
      %68 = dma.done [#allocation4], 256
    $region25: #{tpu_custom_call.1} parent=1 // pred_fallthru
      _
    %69 = vsyncpa [#allocation3], 1
    %70 = vsyncpa [#allocation6], 1
    %71 = vsyncpa [#allocation4], 1

</llo_original>
